<compile_context>
chip_gen: v5e
topology: v5e:2x2
jax: 0.10.0
libtpu: 0.0.40
codegen_flags: <defaults>
</compile_context>

<pallas_src>
import jax
import jax.numpy as jnp
from jax.experimental import pallas as pl
from jax.experimental.pallas import tpu as pltpu


def _round_up(x, m):
    return (x + m - 1) // m * m


def _illu_loss_kernel(low_ref, im_ref, out_ref, lbuf_ref, gbuf_ref):
    n, h, w = low_ref.shape

    # ---- build zero-padded, lane/sublane-aligned fields in VMEM scratch -----
    # Data goes at the aligned origin (0, 0); rows >= h and cols >= w stay zero.
    lbuf_ref[...] = jnp.zeros_like(lbuf_ref)
    gbuf_ref[...] = jnp.zeros_like(gbuf_ref)

    lbuf_ref[:, :h, :w] = low_ref[...]
    im = im_ref[...]                                   # (n, 3, h, w)
    gbuf_ref[:, :h, :w] = (0.299 * im[:, 0, :, :]      # rgb -> gray
                           + 0.587 * im[:, 1, :, :]
                           + 0.114 * im[:, 2, :, :])

    low = lbuf_ref[...]                                # (n, hp, wp)
    gray = gbuf_ref[...]

    # ---- zero-padded |gradients| via cyclic rolls (XLU, no slice copies) -----
    # roll(x, 1, axis)[..., i] == x[..., i-1 mod dim]; index 0 wraps onto a
    # zero row/column (hp >= h+1, wp >= w+1), so this equals the padding=1
    # finite difference on the (h+1, w+1) grid and is 0 everywhere else.
    def grads(x):
        gx = jnp.abs(x - pltpu.roll(x, shift=1, axis=2))   # left neighbour
        gy = jnp.abs(x - pltpu.roll(x, shift=1, axis=1))   # top neighbour
        return gx, gy

    lgx, lgy = grads(low)
    igx, igy = grads(gray)

    # ---- global (min, max) normalisation -----------------------------------
    # The zero-padded bottom row (gx) / right column (gy) lie *inside* the
    # reference reduction window, so the global min is exactly 0: (g - gmin)
    # == g and only the 1/(max - min + eps) = 1/(max + eps) scale is needed.
    # The extra all-zero rows/cols of the aligned buffers cannot change the max
    # (all values are non-negative).
    eps = jnp.float32(1e-4)
    l_sx = 1.0 / (jnp.max(lgx) + eps)
    l_sy = 1.0 / (jnp.max(lgy) + eps)
    i_sx = 1.0 / (jnp.max(igx) + eps)
    i_sy = 1.0 / (jnp.max(igy) + eps)

    # masked_fill_(grad < 0.01, 0.01) == maximum(grad, 0.01); the final
    # torch.abs on the ratio is redundant (both operands are non-negative).
    floor = jnp.float32(0.01)
    inv_dx = pl.reciprocal(jnp.maximum(igx * i_sx, floor), approx=True)  # EUP
    inv_dy = pl.reciprocal(jnp.maximum(igy * i_sy, floor), approx=True)  # EUP

    # Outside the true (h+1, w+1) window the numerators are exactly 0, so the
    # sums over the padded buffers equal the reference sums exactly.
    x_sum = l_sx * jnp.sum(lgx * inv_dx)
    y_sum = l_sy * jnp.sum(lgy * inv_dy)

    count = n * (h + 1) * (w + 1)                      # reference mean count
    out_ref[0, 0] = (x_sum + y_sum) * jnp.float32(1.0 / count)


def illu_loss(input_i_low, input_im):
    """Pallas implementation of the RUAS illumination loss. Returns a scalar."""
    input_i_low = input_i_low.astype(jnp.float32)
    input_im = input_im.astype(jnp.float32)

    n, _, h, w = input_i_low.shape
    low = input_i_low.reshape(n, h, w)        # drop singleton channel (no copy)

    hp = _round_up(h + 1, 8)                  # >= h+1 -> zero bottom rows, sublane aligned
    wp = _round_up(w + 1, 128)                # >= w+1 -> zero right cols, lane aligned

    # VMEM budget: inputs + 2 scratch pads + ~6 full-size live intermediates.
    pad_field = n * hp * wp * 4
    in_bytes = (low.size + input_im.size) * 4
    vmem_need = in_bytes + 8 * pad_field + (4 << 20)
    vmem_limit = int(min(max(vmem_need, 32 << 20), 100 << 20))  # v7x physical is 64 MiB

    out = pl.pallas_call(
        _illu_loss_kernel,
        out_shape=jax.ShapeDtypeStruct((1, 1), jnp.float32),
        in_specs=[
            pl.BlockSpec(memory_space=pltpu.MemorySpace.VMEM),
            pl.BlockSpec(memory_space=pltpu.MemorySpace.VMEM),
        ],
        out_specs=pl.BlockSpec(memory_space=pltpu.MemorySpace.SMEM),
        scratch_shapes=[
            pltpu.VMEM((n, hp, wp), jnp.float32),   # padded low
            pltpu.VMEM((n, hp, wp), jnp.float32),   # padded gray
        ],
        compiler_params=pltpu.CompilerParams(vmem_limit_bytes=vmem_limit),
    )(low, input_im)
    return out[0, 0]


def illu_loss_ref(input_i_low, input_im):
    """Pure-JAX reference, mirrors the PyTorch module exactly."""
    gray = (0.299 * input_im[:, 0:1] + 0.587 * input_im[:, 1:2]
            + 0.114 * input_im[:, 2:3])

    def grads(x):  # x: (N, 1, H, W)
        xp = jnp.pad(x, ((0, 0), (0, 0), (1, 1), (1, 1)))
        gx = jnp.abs(xp[:, :, 1:, 1:] - xp[:, :, 1:, :-1])
        gy = jnp.abs(xp[:, :, 1:, 1:] - xp[:, :, :-1, 1:])

        def norm(g):
            return (g - jnp.min(g)) / (jnp.max(g) - jnp.min(g) + 0.0001)

        return norm(gx), norm(gy)

    lgx, lgy = grads(input_i_low)
    igx, igy = grads(gray)
    igx = jnp.where(igx < 0.01, 0.01, igx)
    igy = jnp.where(igy < 0.01, 0.01, igy)
    return jnp.mean(jnp.abs(lgx / igx) + jnp.abs(lgy / igy))


if __name__ == "__main__":
    key = jax.random.PRNGKey(0)
    k1, k2 = jax.random.split(key)

    N, H, W = 2, 16, 16
    input_i_low = jax.random.uniform(k1, (N, 1, H, W), dtype=jnp.float32)
    input_im = jax.random.uniform(k2, (N, 3, H, W), dtype=jnp.float32)

    loss = jax.block_until_ready(illu_loss(input_i_low, input_im))
    loss_ref = jax.block_until_ready(illu_loss_ref(input_i_low, input_im))

    # Tolerance accounts for the EUP approximate reciprocal (approx=True).
    assert jnp.allclose(loss, loss_ref, rtol=2e-3, atol=1e-4), (loss, loss_ref)
    print("KERNEL_OK")
</pallas_src>

<mosaic_0001>
module attributes {stable_mosaic.version = 11 : i64} {
  func.func @_illu_loss_kernel(%arg0: memref<2x16x16xf32, #tpu.memory_space<vmem>>, %arg1: memref<2x3x16x16xf32, #tpu.memory_space<vmem>>, %arg2: memref<1x1xf32, #tpu.memory_space<smem>>, %arg3: memref<2x24x128xf32, #tpu.memory_space<vmem>>, %arg4: memref<2x24x128xf32, #tpu.memory_space<vmem>>) attributes {dimension_semantics = [], scalar_prefetch = 0 : i64, scratch_operands = 2 : i64, tpu.core_type = #tpu.core_type<tc>} {
    %cst = arith.constant 0.000000e+00 : f32
    %0 = vector.broadcast %cst : f32 to vector<2x24x128xf32>
    %c0 = arith.constant 0 : index
    %c0_0 = arith.constant 0 : index
    %c0_1 = arith.constant 0 : index
    %1 = vector.load %arg3[%c0, %c0_0, %c0_1] : memref<2x24x128xf32, #tpu.memory_space<vmem>>, vector<2x24x128xf32>
    tpu.vector_store %arg3[%c0, %c0_0, %c0_1], %0 {strides = array<i32>} : memref<2x24x128xf32, #tpu.memory_space<vmem>>, vector<2x24x128xf32>,
    %cst_2 = arith.constant 0.000000e+00 : f32
    %2 = vector.broadcast %cst_2 : f32 to vector<2x24x128xf32>
    %c0_3 = arith.constant 0 : index
    %c0_4 = arith.constant 0 : index
    %c0_5 = arith.constant 0 : index
    %3 = vector.load %arg4[%c0_3, %c0_4, %c0_5] : memref<2x24x128xf32, #tpu.memory_space<vmem>>, vector<2x24x128xf32>
    tpu.vector_store %arg4[%c0_3, %c0_4, %c0_5], %2 {strides = array<i32>} : memref<2x24x128xf32, #tpu.memory_space<vmem>>, vector<2x24x128xf32>,
    %c0_6 = arith.constant 0 : index
    %c0_7 = arith.constant 0 : index
    %c0_8 = arith.constant 0 : index
    %4 = vector.load %arg0[%c0_6, %c0_7, %c0_8] : memref<2x16x16xf32, #tpu.memory_space<vmem>>, vector<2x16x16xf32>
    %c0_9 = arith.constant 0 : index
    %c0_10 = arith.constant 0 : index
    %c0_11 = arith.constant 0 : index
    %5 = vector.load %arg3[%c0_9, %c0_10, %c0_11] : memref<2x24x128xf32, #tpu.memory_space<vmem>>, vector<2x16x16xf32>
    tpu.vector_store %arg3[%c0_9, %c0_10, %c0_11], %4 {strides = array<i32>} : memref<2x24x128xf32, #tpu.memory_space<vmem>>, vector<2x16x16xf32>,
    %c0_12 = arith.constant 0 : index
    %c0_13 = arith.constant 0 : index
    %c0_14 = arith.constant 0 : index
    %c0_15 = arith.constant 0 : index
    %6 = vector.load %arg1[%c0_12, %c0_13, %c0_14, %c0_15] : memref<2x3x16x16xf32, #tpu.memory_space<vmem>>, vector<2x3x16x16xf32>
    %7 = vector.extract_strided_slice %6 {offsets = [0, 0, 0, 0], sizes = [2, 1, 16, 16], strides = [1, 1, 1, 1]} : vector<2x3x16x16xf32> to vector<2x1x16x16xf32>
    %8 = vector.shape_cast %7 : vector<2x1x16x16xf32> to vector<2x16x16xf32>
    %cst_16 = arith.constant 2.990000e-01 : f32
    %9 = vector.broadcast %cst_16 : f32 to vector<2x16x16xf32>
    %10 = arith.mulf %9, %8 : vector<2x16x16xf32>
    %11 = vector.extract_strided_slice %6 {offsets = [0, 1, 0, 0], sizes = [2, 1, 16, 16], strides = [1, 1, 1, 1]} : vector<2x3x16x16xf32> to vector<2x1x16x16xf32>
    %12 = vector.shape_cast %11 : vector<2x1x16x16xf32> to vector<2x16x16xf32>
    %cst_17 = arith.constant 5.870000e-01 : f32
    %13 = vector.broadcast %cst_17 : f32 to vector<2x16x16xf32>
    %14 = arith.mulf %13, %12 : vector<2x16x16xf32>
    %15 = arith.addf %10, %14 : vector<2x16x16xf32>
    %16 = vector.extract_strided_slice %6 {offsets = [0, 2, 0, 0], sizes = [2, 1, 16, 16], strides = [1, 1, 1, 1]} : vector<2x3x16x16xf32> to vector<2x1x16x16xf32>
    %17 = vector.shape_cast %16 : vector<2x1x16x16xf32> to vector<2x16x16xf32>
    %cst_18 = arith.constant 1.140000e-01 : f32
    %18 = vector.broadcast %cst_18 : f32 to vector<2x16x16xf32>
    %19 = arith.mulf %18, %17 : vector<2x16x16xf32>
    %20 = arith.addf %15, %19 : vector<2x16x16xf32>
    %c0_19 = arith.constant 0 : index
    %c0_20 = arith.constant 0 : index
    %c0_21 = arith.constant 0 : index
    %21 = vector.load %arg4[%c0_19, %c0_20, %c0_21] : memref<2x24x128xf32, #tpu.memory_space<vmem>>, vector<2x16x16xf32>
    tpu.vector_store %arg4[%c0_19, %c0_20, %c0_21], %20 {strides = array<i32>} : memref<2x24x128xf32, #tpu.memory_space<vmem>>, vector<2x16x16xf32>,
    %c0_22 = arith.constant 0 : index
    %c0_23 = arith.constant 0 : index
    %c0_24 = arith.constant 0 : index
    %22 = vector.load %arg3[%c0_22, %c0_23, %c0_24] : memref<2x24x128xf32, #tpu.memory_space<vmem>>, vector<2x24x128xf32>
    %c0_25 = arith.constant 0 : index
    %c0_26 = arith.constant 0 : index
    %c0_27 = arith.constant 0 : index
    %23 = vector.load %arg4[%c0_25, %c0_26, %c0_27] : memref<2x24x128xf32, #tpu.memory_space<vmem>>, vector<2x24x128xf32>
    %c1_i32 = arith.constant 1 : i32
    %24 = tpu.dynamic_rotate %22 by %c1_i32 dim 2 : vector<2x24x128xf32>, i32 -> vector<2x24x128xf32>
    %25 = arith.subf %22, %24 : vector<2x24x128xf32>
    %26 = math.absf %25 : vector<2x24x128xf32>
    %c1_i32_28 = arith.constant 1 : i32
    %27 = tpu.dynamic_rotate %22 by %c1_i32_28 dim 1 : vector<2x24x128xf32>, i32 -> vector<2x24x128xf32>
    %28 = arith.subf %22, %27 : vector<2x24x128xf32>
    %29 = math.absf %28 : vector<2x24x128xf32>
    %c1_i32_29 = arith.constant 1 : i32
    %30 = tpu.dynamic_rotate %23 by %c1_i32_29 dim 2 : vector<2x24x128xf32>, i32 -> vector<2x24x128xf32>
    %31 = arith.subf %23, %30 : vector<2x24x128xf32>
    %32 = math.absf %31 : vector<2x24x128xf32>
    %c1_i32_30 = arith.constant 1 : i32
    %33 = tpu.dynamic_rotate %23 by %c1_i32_30 dim 1 : vector<2x24x128xf32>, i32 -> vector<2x24x128xf32>
    %34 = arith.subf %23, %33 : vector<2x24x128xf32>
    %35 = math.absf %34 : vector<2x24x128xf32>
    %36 = vector.shape_cast %26 : vector<2x24x128xf32> to vector<1x2x24x128xf32>
    %cst_31 = arith.constant dense<0xFF800000> : vector<1xf32>
    %37 = vector.multi_reduction <maximumf>, %36, %cst_31 [1, 2, 3] : vector<1x2x24x128xf32> to vector<1xf32>
    %38 = vector.shape_cast %37 : vector<1xf32> to vector<1x1x1x1xf32>
    %39 = vector.extract %38[0, 0, 0, 0] : f32 from vector<1x1x1x1xf32>
    %cst_32 = arith.constant 9.99999974E-5 : f32
    %40 = arith.addf %39, %cst_32 : f32
    %cst_33 = arith.constant 1.000000e+00 : f32
    %41 = arith.divf %cst_33, %40 : f32
    %42 = vector.shape_cast %29 : vector<2x24x128xf32> to vector<1x2x24x128xf32>
    %cst_34 = arith.constant dense<0xFF800000> : vector<1xf32>
    %43 = vector.multi_reduction <maximumf>, %42, %cst_34 [1, 2, 3] : vector<1x2x24x128xf32> to vector<1xf32>
    %44 = vector.shape_cast %43 : vector<1xf32> to vector<1x1x1x1xf32>
    %45 = vector.extract %44[0, 0, 0, 0] : f32 from vector<1x1x1x1xf32>
    %cst_35 = arith.constant 9.99999974E-5 : f32
    %46 = arith.addf %45, %cst_35 : f32
    %cst_36 = arith.constant 1.000000e+00 : f32
    %47 = arith.divf %cst_36, %46 : f32
    %48 = vector.shape_cast %32 : vector<2x24x128xf32> to vector<1x2x24x128xf32>
    %cst_37 = arith.constant dense<0xFF800000> : vector<1xf32>
    %49 = vector.multi_reduction <maximumf>, %48, %cst_37 [1, 2, 3] : vector<1x2x24x128xf32> to vector<1xf32>
    %50 = vector.shape_cast %49 : vector<1xf32> to vector<1x1x1x1xf32>
    %51 = vector.extract %50[0, 0, 0, 0] : f32 from vector<1x1x1x1xf32>
    %cst_38 = arith.constant 9.99999974E-5 : f32
    %52 = arith.addf %51, %cst_38 : f32
    %cst_39 = arith.constant 1.000000e+00 : f32
    %53 = arith.divf %cst_39, %52 : f32
    %54 = vector.shape_cast %35 : vector<2x24x128xf32> to vector<1x2x24x128xf32>
    %cst_40 = arith.constant dense<0xFF800000> : vector<1xf32>
    %55 = vector.multi_reduction <maximumf>, %54, %cst_40 [1, 2, 3] : vector<1x2x24x128xf32> to vector<1xf32>
    %56 = vector.shape_cast %55 : vector<1xf32> to vector<1x1x1x1xf32>
    %57 = vector.extract %56[0, 0, 0, 0] : f32 from vector<1x1x1x1xf32>
    %cst_41 = arith.constant 9.99999974E-5 : f32
    %58 = arith.addf %57, %cst_41 : f32
    %cst_42 = arith.constant 1.000000e+00 : f32
    %59 = arith.divf %cst_42, %58 : f32
    %60 = vector.broadcast %53 : f32 to vector<2x24x128xf32>
    %61 = arith.mulf %32, %60 : vector<2x24x128xf32>
    %cst_43 = arith.constant 0.00999999977 : f32
    %62 = vector.broadcast %cst_43 : f32 to vector<2x24x128xf32>
    %63 = arith.maximumf %61, %62 : vector<2x24x128xf32>
    %64 = tpu.reciprocal %63 {approx = true} : vector<2x24x128xf32> -> vector<2x24x128xf32>
    %65 = vector.broadcast %59 : f32 to vector<2x24x128xf32>
    %66 = arith.mulf %35, %65 : vector<2x24x128xf32>
    %cst_44 = arith.constant 0.00999999977 : f32
    %67 = vector.broadcast %cst_44 : f32 to vector<2x24x128xf32>
    %68 = arith.maximumf %66, %67 : vector<2x24x128xf32>
    %69 = tpu.reciprocal %68 {approx = true} : vector<2x24x128xf32> -> vector<2x24x128xf32>
    %70 = arith.mulf %26, %64 : vector<2x24x128xf32>
    %71 = vector.shape_cast %70 : vector<2x24x128xf32> to vector<1x2x24x128xf32>
    %cst_45 = arith.constant dense<0.000000e+00> : vector<1xf32>
    %72 = vector.multi_reduction <add>, %71, %cst_45 [1, 2, 3] : vector<1x2x24x128xf32> to vector<1xf32>
    %73 = vector.shape_cast %72 : vector<1xf32> to vector<1x1x1x1xf32>
    %74 = vector.extract %73[0, 0, 0, 0] : f32 from vector<1x1x1x1xf32>
    %75 = arith.mulf %41, %74 : f32
    %76 = arith.mulf %29, %69 : vector<2x24x128xf32>
    %77 = vector.shape_cast %76 : vector<2x24x128xf32> to vector<1x2x24x128xf32>
    %cst_46 = arith.constant dense<0.000000e+00> : vector<1xf32>
    %78 = vector.multi_reduction <add>, %77, %cst_46 [1, 2, 3] : vector<1x2x24x128xf32> to vector<1xf32>
    %79 = vector.shape_cast %78 : vector<1xf32> to vector<1x1x1x1xf32>
    %80 = vector.extract %79[0, 0, 0, 0] : f32 from vector<1x1x1x1xf32>
    %81 = arith.mulf %47, %80 : f32
    %82 = arith.addf %75, %81 : f32
    %cst_47 = arith.constant 0.00173010386 : f32
    %83 = arith.mulf %82, %cst_47 : f32
    %c0_48 = arith.constant 0 : index
    %c0_49 = arith.constant 0 : index
    %84 = memref.load %arg2[%c0_48, %c0_49] : memref<1x1xf32, #tpu.memory_space<smem>>
    memref.store %83, %arg2[%c0_48, %c0_49] : memref<1x1xf32, #tpu.memory_space<smem>>
    return
  }
}

</mosaic_0001>

<llo_original>
// kernel: tpu_custom_call.1
$region0: #{tpu_custom_call.1}
  #allocation0 [shape = 'u32[]', space=smem, size = 0x4, offset = 0x4, fixed_abs, tag = 'smem constant byte address 0x4 - core index']
  #allocation1 [shape = 'u32[72,128]{1,0:T(1,128)}', space=vmem, size = 0x9000, scoped, tag = 'internal scratch']
  #allocation2 [shape = 'f32[2,24,128]{2,1,0:T(8,128)}', space=vmem, size = 0x6000, scoped, tag = 'scratch operand']
  #allocation3 [shape = 'f32[2,24,128]{2,1,0:T(8,128)}', space=vmem, size = 0x6000, scoped, tag = 'scratch operand']
  %s0 = inlined_call_operand.hbm [shape: f32[2,16,16], index: 0, kind: input, shape index: {}]
  %s1 = inlined_call_operand.hbm [shape: f32[2,3,16,16], index: 1, kind: input, shape index: {}]
  %s2 = inlined_call_operand.hbm [shape: f32[1,1], index: 2, kind: output, shape index: {}]
  %s3 = sld [smem:[#allocation0]]
  $region26: #{tpu_custom_call.1} parent=0
    _
  %s5 = ssub.s32 1, %s3
  %s6 = scalar_select 0, %s5, %s3
  $region1: #{tpu_custom_call.1} parent=0
    #allocation4 [shape = 'u8[16384]{0}', space=vmem, size = 0x4000, scoped, tag = 'input window, operand 0, single buffered']
    #allocation5 [shape = 's32[1]{0}', space=sflag, size = 0x4, scoped, tag = 'scoped memory for tpu_custom_call.1']
    #allocation6 [shape = 's32[1]{0}', space=sflag, size = 0x4, scoped, tag = 'scoped memory for tpu_custom_call.1']
    #allocation7 [shape = 'u8[49152]{0}', space=vmem, size = 0xc000, scoped, tag = 'input window, operand 1, single buffered']
    #allocation8 [shape = 's32[1]{0}', space=sflag, size = 0x4, scoped, tag = 'scoped memory for tpu_custom_call.1']
    #allocation9 [shape = 'u8[512]{0}', space=smem, size = 0x200, scoped, tag = 'output window, operand 0, single buffered']
    %7 = vsyncpa [#allocation5], 0
    %8 = vsyncpa [#allocation8], 0
    %9 = vsyncpa [#allocation6], 0
    // Predicated region
    $region2: #{tpu_custom_call.1} parent=1 // pred_check
      _
    $region3: #{tpu_custom_call.1} parent=1 // pred_check_branch
      %11 = sbr.rel (0) target = $region5
    $region4: #{tpu_custom_call.1} parent=1 // pred_region
      %13 = vsyncadd [#allocation5], 0
      %s14 = sshll.u32 %s0, 4
      %s15 = int_to_ptr.hbm [resolvable:$true] %s14
      %s16 = sshll.u32 [#allocation4], 4
      %s17 = int_to_ptr.vmem [resolvable:$true] %s16
      %22 = dma.hbm_to_vmem [thread:$0]  %s15, 512, %s17, [#allocation5], 128, 128, 8
    $region5: #{tpu_custom_call.1} parent=1 // pred_fallthru
      _
    // Predicated region
    $region6: #{tpu_custom_call.1} parent=1 // pred_check
      _
    $region7: #{tpu_custom_call.1} parent=1 // pred_check_branch
      %24 = sbr.rel (0) target = $region9
    $region8: #{tpu_custom_call.1} parent=1 // pred_region
      %26 = vsyncadd [#allocation8], 0
      %s27 = sshll.u32 %s1, 4
      %s28 = int_to_ptr.hbm [resolvable:$true] %s27
      %s29 = sshll.u32 [#allocation7], 4
      %s30 = int_to_ptr.vmem [resolvable:$true] %s29
      %35 = dma.hbm_to_vmem [thread:$0]  %s28, 1536, %s30, [#allocation8], 128, 128, 8
    $region9: #{tpu_custom_call.1} parent=1 // pred_fallthru
      _
    // Predicated region
    $region10: #{tpu_custom_call.1} parent=1 // pred_check
      _
    $region11: #{tpu_custom_call.1} parent=1 // pred_check_branch
      %37 = sbr.rel (0) target = $region13
    $region12: #{tpu_custom_call.1} parent=1 // pred_region
      %39 = dma.done [#allocation5], 512
    $region13: #{tpu_custom_call.1} parent=1 // pred_fallthru
      _
    // Predicated region
    $region14: #{tpu_custom_call.1} parent=1 // pred_check
      _
    $region15: #{tpu_custom_call.1} parent=1 // pred_check_branch
      %41 = sbr.rel (0) target = $region17
    $region16: #{tpu_custom_call.1} parent=1 // pred_region
      %43 = dma.done [#allocation8], 1536
    $region17: #{tpu_custom_call.1} parent=1 // pred_fallthru
      _
    %44 = vst [vmem:[#allocation2] sm:$0xff] 0.0
    %45 = vst [vmem:[#allocation2 + $0x8] sm:$0xff] 0.0
    %46 = vst [vmem:[#allocation2 + $0x10] sm:$0xff] 0.0
    %47 = vst [vmem:[#allocation2 + $0x18] sm:$0xff] 0.0
    %48 = vst [vmem:[#allocation2 + $0x20] sm:$0xff] 0.0
    %49 = vst [vmem:[#allocation2 + $0x28] sm:$0xff] 0.0
    %50 = vst [vmem:[#allocation3] sm:$0xff] 0.0
    %51 = vst [vmem:[#allocation3 + $0x8] sm:$0xff] 0.0
    %52 = vst [vmem:[#allocation3 + $0x10] sm:$0xff] 0.0
    %53 = vst [vmem:[#allocation3 + $0x18] sm:$0xff] 0.0
    %54 = vst [vmem:[#allocation3 + $0x20] sm:$0xff] 0.0
    %55 = vst [vmem:[#allocation3 + $0x28] sm:$0xff] 0.0
    %v56 = vld [vmem:[#allocation4] sm:$0xff]
    %v57 = vld [vmem:[#allocation4 + $0x8] sm:$0xff]
    %v58 = vld [vmem:[#allocation4 + $0x10] sm:$0xff]
    %v59 = vld [vmem:[#allocation4 + $0x18] sm:$0xff]
    %vm60 = vcmask 130048
    %61 = vst.msk [vmem:[#allocation2] sm:$0xff] %vm60, %v56
    %62 = vst.msk [vmem:[#allocation2 + $0x8] sm:$0xff] %vm60, %v57
    %63 = vst.msk [vmem:[#allocation2 + $0x18] sm:$0xff] %vm60, %v58
    %64 = vst.msk [vmem:[#allocation2 + $0x20] sm:$0xff] %vm60, %v59
    %v65 = vld [vmem:[#allocation7] sm:$0xff]
    %v66 = vld [vmem:[#allocation7 + $0x8] sm:$0xff]
    %v67 = vld [vmem:[#allocation7 + $0x10] sm:$0xff]
    %v68 = vld [vmem:[#allocation7 + $0x18] sm:$0xff]
    %v69 = vld [vmem:[#allocation7 + $0x20] sm:$0xff]
    %v70 = vld [vmem:[#allocation7 + $0x28] sm:$0xff]
    %v71 = vld [vmem:[#allocation7 + $0x30] sm:$0xff]
    %v72 = vld [vmem:[#allocation7 + $0x38] sm:$0xff]
    %v73 = vld [vmem:[#allocation7 + $0x40] sm:$0xff]
    %v74 = vld [vmem:[#allocation7 + $0x48] sm:$0xff]
    %v75 = vld [vmem:[#allocation7 + $0x50] sm:$0xff]
    %v76 = vld [vmem:[#allocation7 + $0x58] sm:$0xff]
    %v77 = vmul.f32 %v65, 0.299
    %v78 = vmul.f32 %v66, 0.299
    %v79 = vmul.f32 %v71, 0.299
    %v80 = vmul.f32 %v72, 0.299
    %v81 = vmul.f32 %v67, 0.587
    %v82 = vmul.f32 %v68, 0.587
    %v83 = vmul.f32 %v73, 0.587
    %v84 = vmul.f32 %v74, 0.587
    %v85 = vadd.f32 %v77, %v81
    %v86 = vadd.f32 %v78, %v82
    %v87 = vadd.f32 %v79, %v83
    %v88 = vadd.f32 %v80, %v84
    %v89 = vmul.f32 %v69, 0.114
    %v90 = vmul.f32 %v70, 0.114
    %v91 = vmul.f32 %v75, 0.114
    %v92 = vmul.f32 %v76, 0.114
    %v93 = vadd.f32 %v85, %v89
    %v94 = vadd.f32 %v86, %v90
    %v95 = vadd.f32 %v87, %v91
    %v96 = vadd.f32 %v88, %v92
    %97 = vst.msk [vmem:[#allocation3] sm:$0xff] %vm60, %v93
    %98 = vst.msk [vmem:[#allocation3 + $0x8] sm:$0xff] %vm60, %v94
    %99 = vst.msk [vmem:[#allocation3 + $0x18] sm:$0xff] %vm60, %v95
    %100 = vst.msk [vmem:[#allocation3 + $0x20] sm:$0xff] %vm60, %v96
    %v101 = vld [vmem:[#allocation2] sm:$0xff]
    %v102 = vld [vmem:[#allocation2 + $0x8] sm:$0xff]
    %v103 = vld [vmem:[#allocation2 + $0x10] sm:$0xff]
    %v104 = vld [vmem:[#allocation2 + $0x18] sm:$0xff]
    %v105 = vld [vmem:[#allocation2 + $0x20] sm:$0xff]
    %v106 = vld [vmem:[#allocation2 + $0x28] sm:$0xff]
    %v107 = vld [vmem:[#allocation3] sm:$0xff]
    %v108 = vld [vmem:[#allocation3 + $0x8] sm:$0xff]
    %v109 = vld [vmem:[#allocation3 + $0x10] sm:$0xff]
    %v110 = vld [vmem:[#allocation3 + $0x18] sm:$0xff]
    %v111 = vld [vmem:[#allocation3 + $0x20] sm:$0xff]
    %v112 = vld [vmem:[#allocation3 + $0x28] sm:$0xff]
    %113 = vrot.lane.b32.xlu0 %v101, 1
    %v114 = vpop.permute.xlu0 %113
    %115 = vrot.lane.b32.xlu0 %v102, 1
    %v116 = vpop.permute.xlu0 %115
    %117 = vrot.lane.b32.xlu0 %v103, 1
    %v118 = vpop.permute.xlu0 %117
    %119 = vrot.lane.b32.xlu0 %v104, 1
    %v120 = vpop.permute.xlu0 %119
    %121 = vrot.lane.b32.xlu0 %v105, 1
    %v122 = vpop.permute.xlu0 %121
    %123 = vrot.lane.b32.xlu0 %v106, 1
    %v124 = vpop.permute.xlu0 %123
    %v125 = vsub.f32 %v101, %v114
    %v126 = vsub.f32 %v102, %v116
    %v127 = vsub.f32 %v103, %v118
    %v128 = vsub.f32 %v104, %v120
    %v129 = vsub.f32 %v105, %v122
    %v130 = vsub.f32 %v106, %v124
    %v131 = vand.u32 2147483647, %v125
    %v132 = vand.u32 2147483647, %v126
    %v133 = vand.u32 2147483647, %v127
    %v134 = vand.u32 2147483647, %v128
    %v135 = vand.u32 2147483647, %v129
    %v136 = vand.u32 2147483647, %v130
    %v137 = vrot.slane %v101, 7
    %v138 = vrot.slane %v104, 7
    %v139 = vrot.slane %v102, 7
    %v140 = vrot.slane %v105, 7
    %v141 = vrot.slane %v103, 7
    %v142 = vrot.slane %v106, 7
    %v143 = vlaneseq
    %v144 = vshrl.u32 %v143, 7
    %vm145 = vcmp.lt.s32.totalorder %v144, 1
    %v146 = vsel %vm145, %v139, %v141
    %v147 = vsel %vm145, %v140, %v142
    %v148 = vsel %vm145, %v137, %v139
    %v149 = vsel %vm145, %v138, %v140
    %v150 = vsel %vm145, %v141, %v137
    %v151 = vsel %vm145, %v142, %v138
    %v152 = vsub.f32 %v101, %v150
    %v153 = vsub.f32 %v102, %v148
    %v154 = vsub.f32 %v103, %v146
    %v155 = vsub.f32 %v104, %v151
    %v156 = vsub.f32 %v105, %v149
    %v157 = vsub.f32 %v106, %v147
    %v158 = vand.u32 2147483647, %v152
    %v159 = vand.u32 2147483647, %v153
    %v160 = vand.u32 2147483647, %v154
    %v161 = vand.u32 2147483647, %v155
    %v162 = vand.u32 2147483647, %v156
    %v163 = vand.u32 2147483647, %v157
    %164 = vrot.lane.b32.xlu0 %v107, 1
    %v165 = vpop.permute.xlu0 %164
    %166 = vrot.lane.b32.xlu0 %v108, 1
    %v167 = vpop.permute.xlu0 %166
    %168 = vrot.lane.b32.xlu0 %v109, 1
    %v169 = vpop.permute.xlu0 %168
    %170 = vrot.lane.b32.xlu0 %v110, 1
    %v171 = vpop.permute.xlu0 %170
    %172 = vrot.lane.b32.xlu0 %v111, 1
    %v173 = vpop.permute.xlu0 %172
    %174 = vrot.lane.b32.xlu0 %v112, 1
    %v175 = vpop.permute.xlu0 %174
    %v176 = vsub.f32 %v107, %v165
    %v177 = vsub.f32 %v108, %v167
    %v178 = vsub.f32 %v109, %v169
    %v179 = vsub.f32 %v110, %v171
    %v180 = vsub.f32 %v111, %v173
    %v181 = vsub.f32 %v112, %v175
    %v182 = vand.u32 2147483647, %v176
    %v183 = vand.u32 2147483647, %v177
    %v184 = vand.u32 2147483647, %v178
    %v185 = vand.u32 2147483647, %v179
    %v186 = vand.u32 2147483647, %v180
    %v187 = vand.u32 2147483647, %v181
    %v188 = vrot.slane %v107, 7
    %v189 = vrot.slane %v110, 7
    %v190 = vrot.slane %v108, 7
    %v191 = vrot.slane %v111, 7
    %v192 = vrot.slane %v109, 7
    %v193 = vrot.slane %v112, 7
    %v194 = vsel %vm145, %v190, %v192
    %v195 = vsel %vm145, %v191, %v193
    %v196 = vsel %vm145, %v188, %v190
    %v197 = vsel %vm145, %v189, %v191
    %v198 = vsel %vm145, %v192, %v188
    %v199 = vsel %vm145, %v193, %v189
    %v200 = vsub.f32 %v107, %v198
    %v201 = vsub.f32 %v108, %v196
    %v202 = vsub.f32 %v109, %v194
    %v203 = vsub.f32 %v110, %v199
    %v204 = vsub.f32 %v111, %v197
    %v205 = vsub.f32 %v112, %v195
    %v206 = vand.u32 2147483647, %v200
    %v207 = vand.u32 2147483647, %v201
    %v208 = vand.u32 2147483647, %v202
    %v209 = vand.u32 2147483647, %v203
    %v210 = vand.u32 2147483647, %v204
    %v211 = vand.u32 2147483647, %v205
    %v212 = vmax.f32 %v131, %v135
    %v213 = vmax.f32 %v132, %v136
    %v214 = vmax.f32 %v212, %v213
    %v215 = vmax.f32 %v133, %v134
    %v216 = vmax.f32 %v214, %v215
    %217 = vmax.xlane.f32.xlu0 %v216
    %v218 = vpop.xlane.xlu0 %217
    %v219 = vrot.slane %v218, 4
    %v220 = vmax.f32 %v218, %v219
    %v221 = vrot.slane %v220, 2
    %v222 = vmax.f32 %v220, %v221
    %v223 = vrot.slane %v222, 1
    %v224 = vmax.f32 %v222, %v223
    %s225 = vtos %v224
    %s226 = sadd.f32 %s225, 0.0001
    %v227 = vstv %s226
    %v228 = vrcp.pop %v227
    %v229 = vmul.f32 %v227, %v228
    %v230 = vsub.f32 1.0, %v229
    %v231 = vmul.f32 %v228, %v230
    %v232 = vadd.f32 %v228, %v231
    %vm233 = vweird.f32 %v227
    %vm234 = vweird.f32 %v228
    %vm235 = vmor %vm233, %vm234
    %v236 = vsel %vm235, %v228, %v232
    %v237 = vand.u32 2147483647, %v227
    %vm238 = vcmp.eq.f32.partialorder %v237, 8.507059e+37
    %v239 = vand.u32 %v227, 2147483648
    %v240 = vor.u32 1.1754944e-38, %v239
    %v241 = vsel %vm238, %v240, %v236
    %s242 = vtos %v241
    %v243 = vmax.f32 %v158, %v162
    %v244 = vmax.f32 %v159, %v163
    %v245 = vmax.f32 %v243, %v244
    %v246 = vmax.f32 %v160, %v161
    %v247 = vmax.f32 %v245, %v246
    %248 = vmax.xlane.f32.xlu0 %v247
    %v249 = vpop.xlane.xlu0 %248
    %v250 = vrot.slane %v249, 4
    %v251 = vmax.f32 %v249, %v250
    %v252 = vrot.slane %v251, 2
    %v253 = vmax.f32 %v251, %v252
    %v254 = vrot.slane %v253, 1
    %v255 = vmax.f32 %v253, %v254
    %s256 = vtos %v255
    %s257 = sadd.f32 %s256, 0.0001
    %v258 = vstv %s257
    %v259 = vrcp.pop %v258
    %v260 = vmul.f32 %v258, %v259
    %v261 = vsub.f32 1.0, %v260
    %v262 = vmul.f32 %v259, %v261
    %v263 = vadd.f32 %v259, %v262
    %vm264 = vweird.f32 %v258
    %vm265 = vweird.f32 %v259
    %vm266 = vmor %vm264, %vm265
    %v267 = vsel %vm266, %v259, %v263
    %v268 = vand.u32 2147483647, %v258
    %vm269 = vcmp.eq.f32.partialorder %v268, 8.507059e+37
    %v270 = vand.u32 %v258, 2147483648
    %v271 = vor.u32 1.1754944e-38, %v270
    %v272 = vsel %vm269, %v271, %v267
    %s273 = vtos %v272
    %v274 = vmax.f32 %v182, %v186
    %v275 = vmax.f32 %v183, %v187
    %v276 = vmax.f32 %v274, %v275
    %v277 = vmax.f32 %v184, %v185
    %v278 = vmax.f32 %v276, %v277
    %279 = vmax.xlane.f32.xlu0 %v278
    %v280 = vpop.xlane.xlu0 %279
    %v281 = vrot.slane %v280, 4
    %v282 = vmax.f32 %v280, %v281
    %v283 = vrot.slane %v282, 2
    %v284 = vmax.f32 %v282, %v283
    %v285 = vrot.slane %v284, 1
    %v286 = vmax.f32 %v284, %v285
    %s287 = vtos %v286
    %s288 = sadd.f32 %s287, 0.0001
    %v289 = vstv %s288
    %v290 = vrcp.pop %v289
    %v291 = vmul.f32 %v289, %v290
    %v292 = vsub.f32 1.0, %v291
    %v293 = vmul.f32 %v290, %v292
    %v294 = vadd.f32 %v290, %v293
    %vm295 = vweird.f32 %v289
    %vm296 = vweird.f32 %v290
    %vm297 = vmor %vm295, %vm296
    %v298 = vsel %vm297, %v290, %v294
    %v299 = vand.u32 2147483647, %v289
    %vm300 = vcmp.eq.f32.partialorder %v299, 8.507059e+37
    %v301 = vand.u32 %v289, 2147483648
    %v302 = vor.u32 1.1754944e-38, %v301
    %v303 = vsel %vm300, %v302, %v298
    %s304 = vtos %v303
    %v305 = vmax.f32 %v206, %v210
    %v306 = vmax.f32 %v207, %v211
    %v307 = vmax.f32 %v305, %v306
    %v308 = vmax.f32 %v208, %v209
    %v309 = vmax.f32 %v307, %v308
    %310 = vmax.xlane.f32.xlu0 %v309
    %v311 = vpop.xlane.xlu0 %310
    %v312 = vrot.slane %v311, 4
    %v313 = vmax.f32 %v311, %v312
    %v314 = vrot.slane %v313, 2
    %v315 = vmax.f32 %v313, %v314
    %v316 = vrot.slane %v315, 1
    %v317 = vmax.f32 %v315, %v316
    %s318 = vtos %v317
    %s319 = sadd.f32 %s318, 0.0001
    %v320 = vstv %s319
    %v321 = vrcp.pop %v320
    %v322 = vmul.f32 %v320, %v321
    %v323 = vsub.f32 1.0, %v322
    %v324 = vmul.f32 %v321, %v323
    %v325 = vadd.f32 %v321, %v324
    %vm326 = vweird.f32 %v320
    %vm327 = vweird.f32 %v321
    %vm328 = vmor %vm326, %vm327
    %v329 = vsel %vm328, %v321, %v325
    %v330 = vand.u32 2147483647, %v320
    %vm331 = vcmp.eq.f32.partialorder %v330, 8.507059e+37
    %v332 = vand.u32 %v320, 2147483648
    %v333 = vor.u32 1.1754944e-38, %v332
    %v334 = vsel %vm331, %v333, %v329
    %s335 = vtos %v334
    %v336 = vstv %s304
    %v337 = vmul.f32 %v182, %v336
    %v338 = vmul.f32 %v183, %v336
    %v339 = vmul.f32 %v184, %v336
    %v340 = vmul.f32 %v185, %v336
    %v341 = vmul.f32 %v186, %v336
    %v342 = vmul.f32 %v187, %v336
    %v343 = vmax.f32 %v337, 0.01
    %v344 = vmax.f32 %v338, 0.01
    %v345 = vmax.f32 %v339, 0.01
    %v346 = vmax.f32 %v340, 0.01
    %v347 = vmax.f32 %v341, 0.01
    %v348 = vmax.f32 %v342, 0.01
    %v349 = vrcp.pop %v343
    %v350 = vrcp.pop %v344
    %v351 = vrcp.pop %v345
    %v352 = vrcp.pop %v346
    %v353 = vrcp.pop %v347
    %v354 = vrcp.pop %v348
    %v355 = vstv %s335
    %v356 = vmul.f32 %v206, %v355
    %v357 = vmul.f32 %v207, %v355
    %v358 = vmul.f32 %v208, %v355
    %v359 = vmul.f32 %v209, %v355
    %v360 = vmul.f32 %v210, %v355
    %v361 = vmul.f32 %v211, %v355
    %v362 = vmax.f32 %v356, 0.01
    %v363 = vmax.f32 %v357, 0.01
    %v364 = vmax.f32 %v358, 0.01
    %v365 = vmax.f32 %v359, 0.01
    %v366 = vmax.f32 %v360, 0.01
    %v367 = vmax.f32 %v361, 0.01
    %v368 = vrcp.pop %v362
    %v369 = vrcp.pop %v363
    %v370 = vrcp.pop %v364
    %v371 = vrcp.pop %v365
    %v372 = vrcp.pop %v366
    %v373 = vrcp.pop %v367
    %v374 = vmul.f32 %v131, %v349
    %v375 = vmul.f32 %v132, %v350
    %v376 = vmul.f32 %v133, %v351
    %v377 = vmul.f32 %v134, %v352
    %v378 = vmul.f32 %v135, %v353
    %v379 = vmul.f32 %v136, %v354
    %v380 = vadd.f32 %v374, %v375
    %v381 = vadd.f32 %v380, %v376
    %v382 = vadd.f32 %v381, %v377
    %v383 = vadd.f32 %v382, %v378
    %v384 = vadd.f32 %v383, %v379
    %385 = vadd.xlane.f32.xlu0 %v384
    %v386 = vpop.xlane.xlu0 %385
    %v387 = vrot.slane %v386, 4
    %v388 = vadd.f32 %v386, %v387
    %v389 = vrot.slane %v388, 2
    %v390 = vadd.f32 %v388, %v389
    %v391 = vrot.slane %v390, 1
    %v392 = vadd.f32 %v390, %v391
    %s393 = vtos %v392
    %s394 = smul.f32 %s242, %s393
    %v395 = vmul.f32 %v158, %v368
    %v396 = vmul.f32 %v159, %v369
    %v397 = vmul.f32 %v160, %v370
    %v398 = vmul.f32 %v161, %v371
    %v399 = vmul.f32 %v162, %v372
    %v400 = vmul.f32 %v163, %v373
    %v401 = vadd.f32 %v395, %v396
    %v402 = vadd.f32 %v401, %v397
    %v403 = vadd.f32 %v402, %v398
    %v404 = vadd.f32 %v403, %v399
    %v405 = vadd.f32 %v404, %v400
    %406 = vadd.xlane.f32.xlu0 %v405
    %v407 = vpop.xlane.xlu0 %406
    %v408 = vrot.slane %v407, 4
    %v409 = vadd.f32 %v407, %v408
    %v410 = vrot.slane %v409, 2
    %v411 = vadd.f32 %v409, %v410
    %v412 = vrot.slane %v411, 1
    %v413 = vadd.f32 %v411, %v412
    %s414 = vtos %v413
    %s415 = smul.f32 %s273, %s414
    %s416 = sadd.f32 %s394, %s415
    %s417 = smul.f32 %s416, 0.0017301039
    %s418 = scalar_lea.smem [#allocation9], 0
    %419 = sst [smem:[%s418]] %s417
    // Predicated region
    $region18: #{tpu_custom_call.1} parent=1 // pred_check
      _
    $region19: #{tpu_custom_call.1} parent=1 // pred_check_branch
      %421 = sbr.rel (0) target = $region21
    $region20: #{tpu_custom_call.1} parent=1 // pred_region
      %423 = vsyncadd [#allocation6], 0
      %s425 = sshll.u32 %s2, 4
      %s426 = int_to_ptr.hbm [resolvable:$true] %s425
      %428 = dma.smem_to_hbm [#allocation9], 16, %s426, [#allocation6]
    $region21: #{tpu_custom_call.1} parent=1 // pred_fallthru
      _
    // Predicated region
    $region22: #{tpu_custom_call.1} parent=1 // pred_check
      _
    $region23: #{tpu_custom_call.1} parent=1 // pred_check_branch
      %430 = sbr.rel (0) target = $region25
    $region24: #{tpu_custom_call.1} parent=1 // pred_region
      %432 = dma.done [#allocation6], 16
    $region25: #{tpu_custom_call.1} parent=1 // pred_fallthru
      _
    %433 = sfence
    %434 = vsyncpa [#allocation5], 1
    %435 = vsyncpa [#allocation8], 1
    %436 = vsyncpa [#allocation6], 1

</llo_original>
